<compile_context>
chip_gen: v7x
topology: tpu7x:2x2x1
jax: 0.10.0
libtpu: 0.0.40
codegen_flags: <defaults>
</compile_context>

<pallas_src>
import functools

import jax
import jax.numpy as jnp
from jax.experimental import pallas as pl
from jax.experimental.pallas import tpu as pltpu


def _round_up(x, m):
    return ((x + m - 1) // m) * m


def _value_mlp_kernel(xT_ref, w1t_ref, b1_ref, w2t_ref, b2_ref, w3_ref, o_ref):
    """Fused feature-major forward pass for one batch tile.

    xT   : (d_in, bb)   bf16   -- concat(state, action)^T, batch along lanes
    w1t  : (128, d_in)  bf16   b1 : (128, 1) f32
    w2t  : (128, 128)   bf16   b2 : (128, 1) f32
    w3   : (1, 128)     bf16
    o    : (1, bb)      f32    -- fc3 output row (b3 is added in the wrapper)
    """
    # fc1 + relu: (128, d_in) @ (d_in, bb) -> (128, bb); bias/ReLU in f32 on the VPU.
    h1 = jnp.dot(w1t_ref[...], xT_ref[...], preferred_element_type=jnp.float32)
    h1 = jnp.maximum(h1 + b1_ref[...], 0.0)

    # fc2 + relu.
    h2 = jnp.dot(w2t_ref[...], h1.astype(jnp.bfloat16),
                 preferred_element_type=jnp.float32)
    h2 = jnp.maximum(h2 + b2_ref[...], 0.0)

    # fc3 (128 -> 1): result is already a lane-dense (1, bb) row -> no relayout needed.
    o_ref[...] = jnp.dot(w3_ref[...], h2.astype(jnp.bfloat16),
                         preferred_element_type=jnp.float32).astype(o_ref.dtype)


def _choose_tiling(B, block_b):
    """Pick (tile_rows, num_tiles).

    Tiles are multiples of 128 (lane-dense x^T blocks and output slabs).  When the batch
    is large enough we prefer >= 2 balanced tiles (even count) so both v7x TensorCores
    are used; on v5e/v6e the extra grid step costs ~0.35 us and is negligible.
    """
    block_b = max(128, _round_up(block_b, 128))
    bb = min(block_b, max(128, _round_up(B, 128)))
    n = pl.cdiv(B, bb)
    if n == 1 and B > 128:
        n = 2
    elif n > 1 and n % 2 == 1:
        n += 1
    bb = max(128, _round_up(pl.cdiv(B, n), 128))
    return bb, pl.cdiv(B, bb)


@functools.partial(jax.jit, static_argnames=("block_b",))
def value_network_forward(state, action, params, block_b=2048):
    """state: (B, state_dim), action: (B, action_dim) -> (B, 1) float32."""
    state = state.astype(jnp.float32)
    action = action.astype(jnp.float32)
    B, state_dim = state.shape
    _, action_dim = action.shape
    d_in = state_dim + action_dim
    w1, b1, w2, b2, w3, b3 = params
    hidden = w1.shape[0]

    bb, num_tiles = _choose_tiling(B, block_b)
    padded_B = bb * num_tiles

    # Feature-major input: concat + pad + transpose in the wrapper (~48 B/row), cast to
    # bf16 so the kernel's input DMA is half the bytes and the MXU runs at bf16 rate.
    x = jnp.concatenate([state, action], axis=-1)
    if padded_B != B:
        x = jnp.pad(x, ((0, padded_B - B), (0, 0)))
    xT = x.T.astype(jnp.bfloat16)                      # (d_in, padded_B)

    w1t = w1.astype(jnp.bfloat16)                      # (hidden, d_in)
    w2t = w2.astype(jnp.bfloat16)                      # (hidden, hidden)
    w3r = w3.astype(jnp.bfloat16)                      # (1, hidden)
    b1c = b1.reshape(hidden, 1).astype(jnp.float32)
    b2c = b2.reshape(hidden, 1).astype(jnp.float32)

    flops = 2 * B * (d_in * hidden + hidden * hidden + hidden)
    bytes_accessed = (2 * padded_B * d_in + 4 * padded_B
                      + 2 * (hidden * d_in + hidden * hidden + hidden)
                      + 4 * 2 * hidden)

    out = pl.pallas_call(
        _value_mlp_kernel,
        out_shape=jax.ShapeDtypeStruct((1, padded_B), jnp.float32),
        grid_spec=pltpu.PrefetchScalarGridSpec(
            num_scalar_prefetch=0,
            grid=(num_tiles,),
            in_specs=[
                pl.BlockSpec((d_in, bb), lambda i: (0, i)),        # x^T batch tile
                pl.BlockSpec((hidden, d_in), lambda i: (0, 0)),    # fc1 weight
                pl.BlockSpec((hidden, 1), lambda i: (0, 0)),       # fc1 bias (column)
                pl.BlockSpec((hidden, hidden), lambda i: (0, 0)),  # fc2 weight
                pl.BlockSpec((hidden, 1), lambda i: (0, 0)),       # fc2 bias (column)
                pl.BlockSpec((1, hidden), lambda i: (0, 0)),       # fc3 weight (row)
            ],
            # Lane-dense output: each grid step writes a (1, bb) column slab.
            out_specs=pl.BlockSpec((1, bb), lambda i: (0, i)),
        ),
        compiler_params=pltpu.CompilerParams(
            dimension_semantics=("parallel",)),   # batch tiles shard across v7x TCs
        cost_estimate=pl.CostEstimate(flops=flops, transcendentals=0,
                                      bytes_accessed=bytes_accessed),
    )(xT, w1t, b1c, w2t, b2c, w3r)

    # (1, padded_B) -> (B, 1); drop padded rows; add b3 here instead of a (1,1) VMEM block.
    return out[0, :B].reshape(B, 1) + b3


def init_params(key, state_dim, action_dim):
    """PyTorch-layout params (weight (out, in), bias (out,)), nn.Linear default init."""
    d_in = state_dim + action_dim
    dims = [(d_in, 128), (128, 128), (128, 1)]
    params = []
    keys = jax.random.split(key, 2 * len(dims))
    for li, (fi, fo) in enumerate(dims):
        bound = 1.0 / jnp.sqrt(jnp.float32(fi))
        w = jax.random.uniform(keys[2 * li], (fo, fi), jnp.float32, -bound, bound)
        b = jax.random.uniform(keys[2 * li + 1], (fo,), jnp.float32, -bound, bound)
        params += [w, b]
    return tuple(params)


def _reference(state, action, params):
    """Pure-f32 reference matching the PyTorch module."""
    w1, b1, w2, b2, w3, b3 = params
    x = jnp.concatenate([state, action], axis=-1)
    h = jnp.maximum(x @ w1.T + b1, 0.0)
    h = jnp.maximum(h @ w2.T + b2, 0.0)
    return h @ w3.T + b3


if __name__ == "__main__":
    state_dim, action_dim, batch = 8, 4, 8
    key = jax.random.PRNGKey(0)
    kp, ks, ka = jax.random.split(key, 3)

    params = init_params(kp, state_dim, action_dim)
    state = jax.random.normal(ks, (batch, state_dim), jnp.float32)
    action = jax.random.normal(ka, (batch, action_dim), jnp.float32)

    out = value_network_forward(state, action, params)
    jax.block_until_ready(out)
    ref = _reference(state, action, params)
    assert out.shape == (batch, 1)
    # bf16 MXU operands with f32 accumulation -> compare against f32 reference loosely.
    assert jnp.allclose(out, ref, atol=2e-2, rtol=2e-2), \
        float(jnp.max(jnp.abs(out - ref)))

    # Also exercise the multi-tile / padded-batch path (2 balanced tiles, padded_B > B).
    B2 = 300
    s2 = jax.random.normal(jax.random.PRNGKey(1), (B2, state_dim), jnp.float32)
    a2 = jax.random.normal(jax.random.PRNGKey(2), (B2, action_dim), jnp.float32)
    out2 = value_network_forward(s2, a2, params, block_b=256)
    jax.block_until_ready(out2)
    ref2 = _reference(s2, a2, params)
    assert out2.shape == (B2, 1)
    assert jnp.allclose(out2, ref2, atol=2e-2, rtol=2e-2), \
        float(jnp.max(jnp.abs(out2 - ref2)))

    print("KERNEL_OK")
</pallas_src>

<mosaic_0001>
module attributes {stable_mosaic.version = 11 : i64} {
  func.func @_value_mlp_kernel(%arg0: i32, %arg1: memref<12x128xbf16, #tpu.memory_space<vmem>>, %arg2: memref<128x12xbf16, #tpu.memory_space<vmem>>, %arg3: memref<128x1xf32, #tpu.memory_space<vmem>>, %arg4: memref<128x128xbf16, #tpu.memory_space<vmem>>, %arg5: memref<128x1xf32, #tpu.memory_space<vmem>>, %arg6: memref<1x128xbf16, #tpu.memory_space<vmem>>, %arg7: memref<1x128xf32, #tpu.memory_space<vmem>>) attributes {dimension_semantics = [#tpu.dimension_semantics<parallel>], iteration_bounds = array<i64: 1>, scalar_prefetch = 0 : i64, scratch_operands = 0 : i64, tpu.core_type = #tpu.core_type<tc>, window_params = [{transform_indices = @transform_0, window_bounds = array<i64: 12, 128>}, {pipeline_mode = #tpu.pipeline_mode<synchronous>, transform_indices = @transform_1, window_bounds = array<i64: 128, 12>}, {pipeline_mode = #tpu.pipeline_mode<synchronous>, transform_indices = @transform_2, window_bounds = array<i64: 128, 1>}, {pipeline_mode = #tpu.pipeline_mode<synchronous>, transform_indices = @transform_3, window_bounds = array<i64: 128, 128>}, {pipeline_mode = #tpu.pipeline_mode<synchronous>, transform_indices = @transform_4, window_bounds = array<i64: 128, 1>}, {pipeline_mode = #tpu.pipeline_mode<synchronous>, transform_indices = @transform_5, window_bounds = array<i64: 1, 128>}, {transform_indices = @transform_6, window_bounds = array<i64: 1, 128>}]} {
    %c0 = arith.constant 0 : index
    %c0_0 = arith.constant 0 : index
    %0 = vector.load %arg2[%c0, %c0_0] : memref<128x12xbf16, #tpu.memory_space<vmem>>, vector<128x12xbf16>
    %c0_1 = arith.constant 0 : index
    %c0_2 = arith.constant 0 : index
    %1 = vector.load %arg1[%c0_1, %c0_2] : memref<12x128xbf16, #tpu.memory_space<vmem>>, vector<12x128xbf16>
    %cst = arith.constant dense<0.000000e+00> : vector<128x128xf32>
    %2 = tpu.matmul %0, %1, %cst {dimension_numbers = #tpu.dot_dimension_numbers<[1], [0], [0], [1], [0, 0, 1, 1], [], []>} : vector<128x12xbf16>, vector<12x128xbf16>, vector<128x128xf32> -> vector<128x128xf32>
    %c0_3 = arith.constant 0 : index
    %c0_4 = arith.constant 0 : index
    %3 = vector.load %arg3[%c0_3, %c0_4] : memref<128x1xf32, #tpu.memory_space<vmem>>, vector<128x1xf32>
    %4 = vector.broadcast %3 : vector<128x1xf32> to vector<128x128xf32>
    %5 = arith.addf %2, %4 : vector<128x128xf32>
    %cst_5 = arith.constant 0.000000e+00 : f32
    %6 = vector.broadcast %cst_5 : f32 to vector<128x128xf32>
    %7 = arith.maximumf %5, %6 : vector<128x128xf32>
    %c0_6 = arith.constant 0 : index
    %c0_7 = arith.constant 0 : index
    %8 = vector.load %arg4[%c0_6, %c0_7] : memref<128x128xbf16, #tpu.memory_space<vmem>>, vector<128x128xbf16>
    %9 = arith.truncf %7 : vector<128x128xf32> to vector<128x128xbf16>
    %cst_8 = arith.constant dense<0.000000e+00> : vector<128x128xf32>
    %10 = tpu.matmul %8, %9, %cst_8 {dimension_numbers = #tpu.dot_dimension_numbers<[1], [0], [0], [1], [0, 0, 1, 1], [], []>} : vector<128x128xbf16>, vector<128x128xbf16>, vector<128x128xf32> -> vector<128x128xf32>
    %c0_9 = arith.constant 0 : index
    %c0_10 = arith.constant 0 : index
    %11 = vector.load %arg5[%c0_9, %c0_10] : memref<128x1xf32, #tpu.memory_space<vmem>>, vector<128x1xf32>
    %12 = vector.broadcast %11 : vector<128x1xf32> to vector<128x128xf32>
    %13 = arith.addf %10, %12 : vector<128x128xf32>
    %cst_11 = arith.constant 0.000000e+00 : f32
    %14 = vector.broadcast %cst_11 : f32 to vector<128x128xf32>
    %15 = arith.maximumf %13, %14 : vector<128x128xf32>
    %c0_12 = arith.constant 0 : index
    %c0_13 = arith.constant 0 : index
    %16 = vector.load %arg6[%c0_12, %c0_13] : memref<1x128xbf16, #tpu.memory_space<vmem>>, vector<1x128xbf16>
    %17 = arith.truncf %15 : vector<128x128xf32> to vector<128x128xbf16>
    %cst_14 = arith.constant dense<0.000000e+00> : vector<1x128xf32>
    %18 = tpu.matmul %16, %17, %cst_14 {dimension_numbers = #tpu.dot_dimension_numbers<[1], [0], [0], [1], [0, 0, 1, 1], [], []>} : vector<1x128xbf16>, vector<128x128xbf16>, vector<1x128xf32> -> vector<1x128xf32>
    %c0_15 = arith.constant 0 : index
    %c0_16 = arith.constant 0 : index
    %19 = vector.load %arg7[%c0_15, %c0_16] : memref<1x128xf32, #tpu.memory_space<vmem>>, vector<1x128xf32>
    tpu.vector_store %arg7[%c0_15, %c0_16], %18 {strides = array<i32>} : memref<1x128xf32, #tpu.memory_space<vmem>>, vector<1x128xf32>,
    return
  }
  func.func @transform_0(%arg0: i32) -> (i32, i32) {
    %c0_i32 = arith.constant 0 : i32
    %c0_i32_0 = arith.constant 0 : i32
    return %c0_i32, %arg0 : i32, i32
  }
  func.func @transform_1(%arg0: i32) -> (i32, i32) {
    %c0_i32 = arith.constant 0 : i32
    %c0_i32_0 = arith.constant 0 : i32
    %c0_i32_1 = arith.constant 0 : i32
    return %c0_i32, %c0_i32_0 : i32, i32
  }
  func.func @transform_2(%arg0: i32) -> (i32, i32) {
    %c0_i32 = arith.constant 0 : i32
    %c0_i32_0 = arith.constant 0 : i32
    %c0_i32_1 = arith.constant 0 : i32
    return %c0_i32, %c0_i32_0 : i32, i32
  }
  func.func @transform_3(%arg0: i32) -> (i32, i32) {
    %c0_i32 = arith.constant 0 : i32
    %c0_i32_0 = arith.constant 0 : i32
    %c0_i32_1 = arith.constant 0 : i32
    return %c0_i32, %c0_i32_0 : i32, i32
  }
  func.func @transform_4(%arg0: i32) -> (i32, i32) {
    %c0_i32 = arith.constant 0 : i32
    %c0_i32_0 = arith.constant 0 : i32
    %c0_i32_1 = arith.constant 0 : i32
    return %c0_i32, %c0_i32_0 : i32, i32
  }
  func.func @transform_5(%arg0: i32) -> (i32, i32) {
    %c0_i32 = arith.constant 0 : i32
    %c0_i32_0 = arith.constant 0 : i32
    %c0_i32_1 = arith.constant 0 : i32
    return %c0_i32, %c0_i32_0 : i32, i32
  }
  func.func @transform_6(%arg0: i32) -> (i32, i32) {
    %c0_i32 = arith.constant 0 : i32
    %c0_i32_0 = arith.constant 0 : i32
    return %c0_i32, %arg0 : i32, i32
  }
}

</mosaic_0001>

<llo_original>
// kernel: value_network_forward.1
$region0: #{value_network_forward.1}
  #allocation0 [shape = 'u32[]', space=smem, size = 0x4, offset = 0x4, fixed_abs, tag = 'smem constant byte address 0x4 - core index']
  #allocation1 [shape = 'u32[144,128]{1,0:T(1,128)}', space=vmem, size = 0x12000, scoped, tag = 'internal scratch']
  %s0 = inlined_call_operand.vmem [shape: bf16[12,128], index: 0, kind: input, shape index: {}]
  %s1 = inlined_call_operand.vmem [shape: bf16[128,12], index: 1, kind: input, shape index: {}]
  %s2 = inlined_call_operand.vmem [shape: f32[128,1], index: 2, kind: input, shape index: {}]
  %s3 = inlined_call_operand.vmem [shape: bf16[128,128], index: 3, kind: input, shape index: {}]
  %s4 = inlined_call_operand.vmem [shape: f32[128,1], index: 4, kind: input, shape index: {}]
  %s5 = inlined_call_operand.vmem [shape: bf16[1,128], index: 5, kind: input, shape index: {}]
  %s6 = inlined_call_operand.vmem [shape: f32[1,128], index: 6, kind: output, shape index: {}]
  %s7 = sld [smem:[#allocation0]]
  $region34: #{value_network_forward.1} parent=0
    _
  %s9 = ssub.s32 1, %s7
  %s10 = scalar_select 0, %s9, %s7
  // Predicated region
  $region2: #{value_network_forward.1} parent=0 // pred_check
    _
  $region3: #{value_network_forward.1} parent=0 // pred_check_branch
    %12 = sbr.rel (0) target = $region5
  $region4: #{value_network_forward.1} parent=0 // pred_region
    _
  $region5: #{value_network_forward.1} parent=0 // pred_fallthru
    _
  // Predicated region
  $region6: #{value_network_forward.1} parent=0 // pred_check
    _
  $region7: #{value_network_forward.1} parent=0 // pred_check_branch
    %14 = sbr.rel (0) target = $region9
  $region8: #{value_network_forward.1} parent=0 // pred_region
    _
  $region9: #{value_network_forward.1} parent=0 // pred_fallthru
    _
  // Predicated region
  $region10: #{value_network_forward.1} parent=0 // pred_check
    _
  $region11: #{value_network_forward.1} parent=0 // pred_check_branch
    %16 = sbr.rel (0) target = $region13
  $region12: #{value_network_forward.1} parent=0 // pred_region
    _
  $region13: #{value_network_forward.1} parent=0 // pred_fallthru
    _
  // Predicated region
  $region14: #{value_network_forward.1} parent=0 // pred_check
    _
  $region15: #{value_network_forward.1} parent=0 // pred_check_branch
    %18 = sbr.rel (0) target = $region17
  $region16: #{value_network_forward.1} parent=0 // pred_region
    _
  $region17: #{value_network_forward.1} parent=0 // pred_fallthru
    _
  // Predicated region
  $region18: #{value_network_forward.1} parent=0 // pred_check
    _
  $region19: #{value_network_forward.1} parent=0 // pred_check_branch
    %20 = sbr.rel (0) target = $region21
  $region20: #{value_network_forward.1} parent=0 // pred_region
    _
  $region21: #{value_network_forward.1} parent=0 // pred_fallthru
    _
  // Predicated region
  $region22: #{value_network_forward.1} parent=0 // pred_check
    _
  $region23: #{value_network_forward.1} parent=0 // pred_check_branch
    %22 = sbr.rel (0) target = $region25
  $region24: #{value_network_forward.1} parent=0 // pred_region
    _
  $region25: #{value_network_forward.1} parent=0 // pred_fallthru
    _
  %v24 = vld [vmem:[%s1] sm:$0xf]
  %v25 = vld [vmem:[%s1 + $0x4] sm:$0xf]
  %v26 = vld [vmem:[%s1 + $0x8] sm:$0xf]
  %v27 = vld [vmem:[%s1 + $0xc] sm:$0xf]
  %v28 = vld [vmem:[%s1 + $0x10] sm:$0xf]
  %v29 = vld [vmem:[%s1 + $0x14] sm:$0xf]
  %v30 = vld [vmem:[%s1 + $0x18] sm:$0xf]
  %v31 = vld [vmem:[%s1 + $0x1c] sm:$0xf]
  %v32 = vld [vmem:[%s1 + $0x20] sm:$0xf]
  %v33 = vld [vmem:[%s1 + $0x24] sm:$0xf]
  %v34 = vld [vmem:[%s1 + $0x28] sm:$0xf]
  %v35 = vld [vmem:[%s1 + $0x2c] sm:$0xf]
  %v36 = vld [vmem:[%s1 + $0x30] sm:$0xf]
  %v37 = vld [vmem:[%s1 + $0x34] sm:$0xf]
  %v38 = vld [vmem:[%s1 + $0x38] sm:$0xf]
  %v39 = vld [vmem:[%s1 + $0x3c] sm:$0xf]
  %v40 = vld [vmem:[%s0] sm:$0xf]
  %v41 = vld [vmem:[%s0 + $0x4] sm:$0x3]
  %v42 = vld [vmem:[%s2] sm:$0xff]
  %v43 = vld [vmem:[%s2 + $0x8] sm:$0xff]
  %v44 = vld [vmem:[%s2 + $0x10] sm:$0xff]
  %v45 = vld [vmem:[%s2 + $0x18] sm:$0xff]
  %v46 = vld [vmem:[%s2 + $0x20] sm:$0xff]
  %v47 = vld [vmem:[%s2 + $0x28] sm:$0xff]
  %v48 = vld [vmem:[%s2 + $0x30] sm:$0xff]
  %v49 = vld [vmem:[%s2 + $0x38] sm:$0xff]
  %v50 = vld [vmem:[%s2 + $0x40] sm:$0xff]
  %v51 = vld [vmem:[%s2 + $0x48] sm:$0xff]
  %v52 = vld [vmem:[%s2 + $0x50] sm:$0xff]
  %v53 = vld [vmem:[%s2 + $0x58] sm:$0xff]
  %v54 = vld [vmem:[%s2 + $0x60] sm:$0xff]
  %v55 = vld [vmem:[%s2 + $0x68] sm:$0xff]
  %v56 = vld [vmem:[%s2 + $0x70] sm:$0xff]
  %v57 = vld [vmem:[%s2 + $0x78] sm:$0xff]
  %59 = vset.pattern.permute.xlu0 0
  %60 = vperm.xlu0 %59, %v42
  %v61 = vpop.permute.xlu0 %60
  %64 = vset.pattern.permute.xlu0 0
  %65 = vperm.xlu0 %64, %v43
  %v66 = vpop.permute.xlu0 %65
  %69 = vset.pattern.permute.xlu0 0
  %70 = vperm.xlu0 %69, %v44
  %v71 = vpop.permute.xlu0 %70
  %74 = vset.pattern.permute.xlu0 0
  %75 = vperm.xlu0 %74, %v45
  %v76 = vpop.permute.xlu0 %75
  %79 = vset.pattern.permute.xlu0 0
  %80 = vperm.xlu0 %79, %v46
  %v81 = vpop.permute.xlu0 %80
  %84 = vset.pattern.permute.xlu0 0
  %85 = vperm.xlu0 %84, %v47
  %v86 = vpop.permute.xlu0 %85
  %89 = vset.pattern.permute.xlu0 0
  %90 = vperm.xlu0 %89, %v48
  %v91 = vpop.permute.xlu0 %90
  %94 = vset.pattern.permute.xlu0 0
  %95 = vperm.xlu0 %94, %v49
  %v96 = vpop.permute.xlu0 %95
  %99 = vset.pattern.permute.xlu0 0
  %100 = vperm.xlu0 %99, %v50
  %v101 = vpop.permute.xlu0 %100
  %104 = vset.pattern.permute.xlu0 0
  %105 = vperm.xlu0 %104, %v51
  %v106 = vpop.permute.xlu0 %105
  %109 = vset.pattern.permute.xlu0 0
  %110 = vperm.xlu0 %109, %v52
  %v111 = vpop.permute.xlu0 %110
  %114 = vset.pattern.permute.xlu0 0
  %115 = vperm.xlu0 %114, %v53
  %v116 = vpop.permute.xlu0 %115
  %119 = vset.pattern.permute.xlu0 0
  %120 = vperm.xlu0 %119, %v54
  %v121 = vpop.permute.xlu0 %120
  %124 = vset.pattern.permute.xlu0 0
  %125 = vperm.xlu0 %124, %v55
  %v126 = vpop.permute.xlu0 %125
  %129 = vset.pattern.permute.xlu0 0
  %130 = vperm.xlu0 %129, %v56
  %v131 = vpop.permute.xlu0 %130
  %134 = vset.pattern.permute.xlu0 0
  %135 = vperm.xlu0 %134, %v57
  %v136 = vpop.permute.xlu0 %135
  %v154 = vunpack.c.l.b16 %v24
  %v155 = vunpack.c.l.b16 %v25
  %v156 = vunpack.c.l.b16 %v26
  %v157 = vunpack.c.l.b16 %v27
  %v158 = vunpack.c.l.b16 %v28
  %v159 = vunpack.c.l.b16 %v29
  %v160 = vunpack.c.l.b16 %v30
  %v161 = vunpack.c.l.b16 %v31
  %v162 = vunpack.c.l.b16 %v32
  %v163 = vunpack.c.l.b16 %v33
  %v164 = vunpack.c.l.b16 %v34
  %v165 = vunpack.c.l.b16 %v35
  %v166 = vunpack.c.l.b16 %v36
  %v167 = vunpack.c.l.b16 %v37
  %v168 = vunpack.c.l.b16 %v38
  %v169 = vunpack.c.l.b16 %v39
  %v170 = vpack.c.b16 %v155, %v154
  %v171 = vpack.c.b16 %v157, %v156
  %v172 = vpack.c.b16 %v159, %v158
  %v173 = vpack.c.b16 %v161, %v160
  %v174 = vpack.c.b16 %v163, %v162
  %v175 = vpack.c.b16 %v165, %v164
  %v176 = vpack.c.b16 %v167, %v166
  %v177 = vpack.c.b16 %v169, %v168
  %v180 = vunpack.c.l.b16 %v40
  %v181 = vunpack.c.l.b16 %v41
  %v182 = vpack.c.b16 %v181, %v180
  %vm183 = vcmask 97280
  %v185 = vsel %vm183, %v170, 0
  %v188 = vsel %vm183, %v171, 0
  %v191 = vsel %vm183, %v172, 0
  %v194 = vsel %vm183, %v173, 0
  %v197 = vsel %vm183, %v174, 0
  %v200 = vsel %vm183, %v175, 0
  %v203 = vsel %vm183, %v176, 0
  %v206 = vsel %vm183, %v177, 0
  %vm208 = vcmask 1045504
  %v210 = vsel %vm208, %v182, 0
  %212 = vmatprep.subr.bf16.mxu0 0
  %213 = vmatpush1.bf16.msra.mxu0 %v210
  %214 = vmatprep.subr.bf16.mxu0 0
  %215 = vmatpush1.bf16.msra.mxu0 0
  %216 = vmatprep.subr.bf16.mxu0 0
  %217 = vmatpush1.bf16.msra.mxu0 0
  %218 = vmatprep.subr.bf16.mxu0 0
  %219 = vmatpush1.bf16.msra.mxu0 0
  %220 = vmatprep.subr.bf16.mxu0 0
  %221 = vmatpush1.bf16.msra.mxu0 0
  %222 = vmatprep.subr.bf16.mxu0 0
  %223 = vmatpush1.bf16.msra.mxu0 0
  %224 = vmatprep.subr.bf16.mxu0 0
  %225 = vmatpush1.bf16.msra.mxu0 0
  %226 = vmatprep.subr.bf16.mxu0 0
  %227 = vmatpush1.bf16.msra.mxu0 0
  %228 = vmatprep.subr.bf16.mxu0 0
  %229 = vmatpush1.bf16.msra.mxu0 0
  %230 = vmatprep.subr.bf16.mxu0 0
  %231 = vmatpush1.bf16.msra.mxu0 0
  %232 = vmatprep.subr.bf16.mxu0 0
  %233 = vmatpush1.bf16.msra.mxu0 0
  %234 = vmatprep.subr.bf16.mxu0 0
  %235 = vmatpush1.bf16.msra.mxu0 0
  %236 = vmatprep.subr.bf16.mxu0 0
  %237 = vmatpush1.bf16.msra.mxu0 0
  %238 = vmatprep.subr.bf16.mxu0 0
  %239 = vmatpush1.bf16.msra.mxu0 0
  %240 = vmatprep.subr.bf16.mxu0 0
  %241 = vmatpush1.bf16.msra.mxu0 0
  %242 = vmatprep.subr.bf16.mxu0 0
  %243 = vmatpush1.bf16.msra.mxu0 0
  %244 = vmatprep.mubr.bf16.mxu0 0
  %245 = vmatmul.mubr.bf16.gmra.mrb[0].mxu0 %v185
  %v246 = vpop.f32.mrb[0].mxu0
  %v247 = vadd.f32 %v61, %v246
  %v248 = vpop.f32.mrb[0].mxu0
  %v249 = vpop.f32.mrb[0].mxu0
  %v250 = vadd.f32 %v66, %v249
  %v251 = vpop.f32.mrb[0].mxu0
  %252 = vmatprep.mubr.bf16.mxu0 0
  %253 = vmatmul.mubr.bf16.gmra.mrb[0].mxu0 %v188
  %v254 = vpop.f32.mrb[0].mxu0
  %v255 = vadd.f32 %v71, %v254
  %v256 = vpop.f32.mrb[0].mxu0
  %v257 = vpop.f32.mrb[0].mxu0
  %v258 = vadd.f32 %v76, %v257
  %v259 = vpop.f32.mrb[0].mxu0
  %260 = vmatprep.mubr.bf16.mxu0 0
  %261 = vmatmul.mubr.bf16.gmra.mrb[0].mxu0 %v191
  %v262 = vpop.f32.mrb[0].mxu0
  %v263 = vadd.f32 %v81, %v262
  %v264 = vpop.f32.mrb[0].mxu0
  %v265 = vpop.f32.mrb[0].mxu0
  %v266 = vadd.f32 %v86, %v265
  %v267 = vpop.f32.mrb[0].mxu0
  %268 = vmatprep.mubr.bf16.mxu0 0
  %269 = vmatmul.mubr.bf16.gmra.mrb[0].mxu0 %v194
  %v270 = vpop.f32.mrb[0].mxu0
  %v271 = vadd.f32 %v91, %v270
  %v272 = vpop.f32.mrb[0].mxu0
  %v273 = vpop.f32.mrb[0].mxu0
  %v274 = vadd.f32 %v96, %v273
  %v275 = vpop.f32.mrb[0].mxu0
  %276 = vmatprep.mubr.bf16.mxu0 0
  %277 = vmatmul.mubr.bf16.gmra.mrb[0].mxu0 %v197
  %v278 = vpop.f32.mrb[0].mxu0
  %v279 = vadd.f32 %v101, %v278
  %v280 = vpop.f32.mrb[0].mxu0
  %v281 = vpop.f32.mrb[0].mxu0
  %v282 = vadd.f32 %v106, %v281
  %v283 = vpop.f32.mrb[0].mxu0
  %284 = vmatprep.mubr.bf16.mxu0 0
  %285 = vmatmul.mubr.bf16.gmra.mrb[0].mxu0 %v200
  %v286 = vpop.f32.mrb[0].mxu0
  %v287 = vadd.f32 %v111, %v286
  %v288 = vpop.f32.mrb[0].mxu0
  %v289 = vpop.f32.mrb[0].mxu0
  %v290 = vadd.f32 %v116, %v289
  %v291 = vpop.f32.mrb[0].mxu0
  %292 = vmatprep.mubr.bf16.mxu0 0
  %293 = vmatmul.mubr.bf16.gmra.mrb[0].mxu0 %v203
  %v294 = vpop.f32.mrb[0].mxu0
  %v295 = vadd.f32 %v121, %v294
  %v296 = vpop.f32.mrb[0].mxu0
  %v297 = vpop.f32.mrb[0].mxu0
  %v298 = vadd.f32 %v126, %v297
  %v299 = vpop.f32.mrb[0].mxu0
  %300 = vmatprep.mubr.bf16.mxu0 0
  %301 = vmatmul.mubr.bf16.gmra.mrb[0].mxu0 %v206
  %v302 = vpop.f32.mrb[0].mxu0
  %v303 = vadd.f32 %v131, %v302
  %v304 = vpop.f32.mrb[0].mxu0
  %v305 = vpop.f32.mrb[0].mxu0
  %v306 = vadd.f32 %v136, %v305
  %v307 = vpop.f32.mrb[0].mxu0
  %308 = vdwg.mxu0
  %v309 = vmax.f32 %v247, 0.0
  %v310 = vmax.f32 %v250, 0.0
  %v311 = vmax.f32 %v255, 0.0
  %v312 = vmax.f32 %v258, 0.0
  %v313 = vmax.f32 %v263, 0.0
  %v314 = vmax.f32 %v266, 0.0
  %v315 = vmax.f32 %v271, 0.0
  %v316 = vmax.f32 %v274, 0.0
  %v317 = vmax.f32 %v279, 0.0
  %v318 = vmax.f32 %v282, 0.0
  %v319 = vmax.f32 %v287, 0.0
  %v320 = vmax.f32 %v290, 0.0
  %v321 = vmax.f32 %v295, 0.0
  %v322 = vmax.f32 %v298, 0.0
  %v323 = vmax.f32 %v303, 0.0
  %v324 = vmax.f32 %v306, 0.0
  %v325 = vld [vmem:[%s3] sm:$0xf]
  %v326 = vld [vmem:[%s3 + $0x4] sm:$0xf]
  %v327 = vld [vmem:[%s3 + $0x8] sm:$0xf]
  %v328 = vld [vmem:[%s3 + $0xc] sm:$0xf]
  %v329 = vld [vmem:[%s3 + $0x10] sm:$0xf]
  %v330 = vld [vmem:[%s3 + $0x14] sm:$0xf]
  %v331 = vld [vmem:[%s3 + $0x18] sm:$0xf]
  %v332 = vld [vmem:[%s3 + $0x1c] sm:$0xf]
  %v333 = vld [vmem:[%s3 + $0x20] sm:$0xf]
  %v334 = vld [vmem:[%s3 + $0x24] sm:$0xf]
  %v335 = vld [vmem:[%s3 + $0x28] sm:$0xf]
  %v336 = vld [vmem:[%s3 + $0x2c] sm:$0xf]
  %v337 = vld [vmem:[%s3 + $0x30] sm:$0xf]
  %v338 = vld [vmem:[%s3 + $0x34] sm:$0xf]
  %v339 = vld [vmem:[%s3 + $0x38] sm:$0xf]
  %v340 = vld [vmem:[%s3 + $0x3c] sm:$0xf]
  %v341 = vpack.c.bf16 %v310, %v309
  %v342 = vpack.c.bf16 %v312, %v311
  %v343 = vpack.c.bf16 %v314, %v313
  %v344 = vpack.c.bf16 %v316, %v315
  %v345 = vpack.c.bf16 %v318, %v317
  %v346 = vpack.c.bf16 %v320, %v319
  %v347 = vpack.c.bf16 %v322, %v321
  %v348 = vpack.c.bf16 %v324, %v323
  %v349 = vld [vmem:[%s4] sm:$0xff]
  %v350 = vld [vmem:[%s4 + $0x8] sm:$0xff]
  %v351 = vld [vmem:[%s4 + $0x10] sm:$0xff]
  %v352 = vld [vmem:[%s4 + $0x18] sm:$0xff]
  %v353 = vld [vmem:[%s4 + $0x20] sm:$0xff]
  %v354 = vld [vmem:[%s4 + $0x28] sm:$0xff]
  %v355 = vld [vmem:[%s4 + $0x30] sm:$0xff]
  %v356 = vld [vmem:[%s4 + $0x38] sm:$0xff]
  %v357 = vld [vmem:[%s4 + $0x40] sm:$0xff]
  %v358 = vld [vmem:[%s4 + $0x48] sm:$0xff]
  %v359 = vld [vmem:[%s4 + $0x50] sm:$0xff]
  %v360 = vld [vmem:[%s4 + $0x58] sm:$0xff]
  %v361 = vld [vmem:[%s4 + $0x60] sm:$0xff]
  %v362 = vld [vmem:[%s4 + $0x68] sm:$0xff]
  %v363 = vld [vmem:[%s4 + $0x70] sm:$0xff]
  %v364 = vld [vmem:[%s4 + $0x78] sm:$0xff]
  %366 = vset.pattern.permute.xlu0 0
  %367 = vperm.xlu0 %366, %v349
  %v368 = vpop.permute.xlu0 %367
  %371 = vset.pattern.permute.xlu0 0
  %372 = vperm.xlu0 %371, %v350
  %v373 = vpop.permute.xlu0 %372
  %376 = vset.pattern.permute.xlu0 0
  %377 = vperm.xlu0 %376, %v351
  %v378 = vpop.permute.xlu0 %377
  %381 = vset.pattern.permute.xlu0 0
  %382 = vperm.xlu0 %381, %v352
  %v383 = vpop.permute.xlu0 %382
  %386 = vset.pattern.permute.xlu0 0
  %387 = vperm.xlu0 %386, %v353
  %v388 = vpop.permute.xlu0 %387
  %391 = vset.pattern.permute.xlu0 0
  %392 = vperm.xlu0 %391, %v354
  %v393 = vpop.permute.xlu0 %392
  %396 = vset.pattern.permute.xlu0 0
  %397 = vperm.xlu0 %396, %v355
  %v398 = vpop.permute.xlu0 %397
  %401 = vset.pattern.permute.xlu0 0
  %402 = vperm.xlu0 %401, %v356
  %v403 = vpop.permute.xlu0 %402
  %406 = vset.pattern.permute.xlu0 0
  %407 = vperm.xlu0 %406, %v357
  %v408 = vpop.permute.xlu0 %407
  %411 = vset.pattern.permute.xlu0 0
  %412 = vperm.xlu0 %411, %v358
  %v413 = vpop.permute.xlu0 %412
  %416 = vset.pattern.permute.xlu0 0
  %417 = vperm.xlu0 %416, %v359
  %v418 = vpop.permute.xlu0 %417
  %421 = vset.pattern.permute.xlu0 0
  %422 = vperm.xlu0 %421, %v360
  %v423 = vpop.permute.xlu0 %422
  %426 = vset.pattern.permute.xlu0 0
  %427 = vperm.xlu0 %426, %v361
  %v428 = vpop.permute.xlu0 %427
  %431 = vset.pattern.permute.xlu0 0
  %432 = vperm.xlu0 %431, %v362
  %v433 = vpop.permute.xlu0 %432
  %436 = vset.pattern.permute.xlu0 0
  %437 = vperm.xlu0 %436, %v363
  %v438 = vpop.permute.xlu0 %437
  %441 = vset.pattern.permute.xlu0 0
  %442 = vperm.xlu0 %441, %v364
  %v443 = vpop.permute.xlu0 %442
  %v461 = vunpack.c.l.b16 %v325
  %v462 = vunpack.c.l.b16 %v326
  %v463 = vunpack.c.l.b16 %v327
  %v464 = vunpack.c.l.b16 %v328
  %v465 = vunpack.c.l.b16 %v329
  %v466 = vunpack.c.l.b16 %v330
  %v467 = vunpack.c.l.b16 %v331
  %v468 = vunpack.c.l.b16 %v332
  %v469 = vunpack.c.l.b16 %v333
  %v470 = vunpack.c.l.b16 %v334
  %v471 = vunpack.c.l.b16 %v335
  %v472 = vunpack.c.l.b16 %v336
  %v473 = vunpack.c.l.b16 %v337
  %v474 = vunpack.c.l.b16 %v338
  %v475 = vunpack.c.l.b16 %v339
  %v476 = vunpack.c.l.b16 %v340
  %v477 = vpack.c.b16 %v462, %v461
  %v478 = vpack.c.b16 %v464, %v463
  %v479 = vpack.c.b16 %v466, %v465
  %v480 = vpack.c.b16 %v468, %v467
  %v481 = vpack.c.b16 %v470, %v469
  %v482 = vpack.c.b16 %v472, %v471
  %v483 = vpack.c.b16 %v474, %v473
  %v484 = vpack.c.b16 %v476, %v475
  %493 = vmatprep.subr.bf16.mxu0 0
  %494 = vmatpush1.bf16.msra.mxu0 %v341
  %495 = vmatprep.subr.bf16.mxu0 0
  %496 = vmatpush1.bf16.msra.mxu0 %v342
  %497 = vmatprep.subr.bf16.mxu0 0
  %498 = vmatpush1.bf16.msra.mxu0 %v343
  %499 = vmatprep.subr.bf16.mxu0 0
  %500 = vmatpush1.bf16.msra.mxu0 %v344
  %501 = vmatprep.subr.bf16.mxu0 0
  %502 = vmatpush1.bf16.msra.mxu0 %v345
  %503 = vmatprep.subr.bf16.mxu0 0
  %504 = vmatpush1.bf16.msra.mxu0 %v346
  %505 = vmatprep.subr.bf16.mxu0 0
  %506 = vmatpush1.bf16.msra.mxu0 %v347
  %507 = vmatprep.subr.bf16.mxu0 0
  %508 = vmatpush1.bf16.msra.mxu0 %v348
  %509 = vmatprep.subr.bf16.mxu0 0
  %510 = vmatpush1.bf16.msra.mxu0 0
  %511 = vmatprep.subr.bf16.mxu0 0
  %512 = vmatpush1.bf16.msra.mxu0 0
  %513 = vmatprep.subr.bf16.mxu0 0
  %514 = vmatpush1.bf16.msra.mxu0 0
  %515 = vmatprep.subr.bf16.mxu0 0
  %516 = vmatpush1.bf16.msra.mxu0 0
  %517 = vmatprep.subr.bf16.mxu0 0
  %518 = vmatpush1.bf16.msra.mxu0 0
  %519 = vmatprep.subr.bf16.mxu0 0
  %520 = vmatpush1.bf16.msra.mxu0 0
  %521 = vmatprep.subr.bf16.mxu0 0
  %522 = vmatpush1.bf16.msra.mxu0 0
  %523 = vmatprep.subr.bf16.mxu0 0
  %524 = vmatpush1.bf16.msra.mxu0 0
  %525 = vmatprep.mubr.bf16.mxu0 0
  %526 = vmatmul.mubr.bf16.gmra.mrb[0].mxu0 %v477
  %v527 = vpop.f32.mrb[0].mxu0
  %v528 = vadd.f32 %v368, %v527
  %v529 = vpop.f32.mrb[0].mxu0
  %v530 = vpop.f32.mrb[0].mxu0
  %v531 = vadd.f32 %v373, %v530
  %v532 = vpop.f32.mrb[0].mxu0
  %533 = vmatprep.mubr.bf16.mxu0 0
  %534 = vmatmul.mubr.bf16.gmra.mrb[0].mxu0 %v478
  %v535 = vpop.f32.mrb[0].mxu0
  %v536 = vadd.f32 %v378, %v535
  %v537 = vpop.f32.mrb[0].mxu0
  %v538 = vpop.f32.mrb[0].mxu0
  %v539 = vadd.f32 %v383, %v538
  %v540 = vpop.f32.mrb[0].mxu0
  %541 = vmatprep.mubr.bf16.mxu0 0
  %542 = vmatmul.mubr.bf16.gmra.mrb[0].mxu0 %v479
  %v543 = vpop.f32.mrb[0].mxu0
  %v544 = vadd.f32 %v388, %v543
  %v545 = vpop.f32.mrb[0].mxu0
  %v546 = vpop.f32.mrb[0].mxu0
  %v547 = vadd.f32 %v393, %v546
  %v548 = vpop.f32.mrb[0].mxu0
  %549 = vmatprep.mubr.bf16.mxu0 0
  %550 = vmatmul.mubr.bf16.gmra.mrb[0].mxu0 %v480
  %v551 = vpop.f32.mrb[0].mxu0
  %v552 = vadd.f32 %v398, %v551
  %v553 = vpop.f32.mrb[0].mxu0
  %v554 = vpop.f32.mrb[0].mxu0
  %v555 = vadd.f32 %v403, %v554
  %v556 = vpop.f32.mrb[0].mxu0
  %557 = vmatprep.mubr.bf16.mxu0 0
  %558 = vmatmul.mubr.bf16.gmra.mrb[0].mxu0 %v481
  %v559 = vpop.f32.mrb[0].mxu0
  %v560 = vadd.f32 %v408, %v559
  %v561 = vpop.f32.mrb[0].mxu0
  %v562 = vpop.f32.mrb[0].mxu0
  %v563 = vadd.f32 %v413, %v562
  %v564 = vpop.f32.mrb[0].mxu0
  %565 = vmatprep.mubr.bf16.mxu0 0
  %566 = vmatmul.mubr.bf16.gmra.mrb[0].mxu0 %v482
  %v567 = vpop.f32.mrb[0].mxu0
  %v568 = vadd.f32 %v418, %v567
  %v569 = vpop.f32.mrb[0].mxu0
  %v570 = vpop.f32.mrb[0].mxu0
  %v571 = vadd.f32 %v423, %v570
  %v572 = vpop.f32.mrb[0].mxu0
  %573 = vmatprep.mubr.bf16.mxu0 0
  %574 = vmatmul.mubr.bf16.gmra.mrb[0].mxu0 %v483
  %v575 = vpop.f32.mrb[0].mxu0
  %v576 = vadd.f32 %v428, %v575
  %v577 = vpop.f32.mrb[0].mxu0
  %v578 = vpop.f32.mrb[0].mxu0
  %v579 = vadd.f32 %v433, %v578
  %v580 = vpop.f32.mrb[0].mxu0
  %581 = vmatprep.mubr.bf16.mxu0 0
  %582 = vmatmul.mubr.bf16.gmra.mrb[0].mxu0 %v484
  %v583 = vpop.f32.mrb[0].mxu0
  %v584 = vadd.f32 %v438, %v583
  %v585 = vpop.f32.mrb[0].mxu0
  %v586 = vpop.f32.mrb[0].mxu0
  %v587 = vadd.f32 %v443, %v586
  %v588 = vpop.f32.mrb[0].mxu0
  %589 = vdwg.mxu0
  %v590 = vmax.f32 %v528, 0.0
  %v591 = vmax.f32 %v531, 0.0
  %v592 = vmax.f32 %v536, 0.0
  %v593 = vmax.f32 %v539, 0.0
  %v594 = vmax.f32 %v544, 0.0
  %v595 = vmax.f32 %v547, 0.0
  %v596 = vmax.f32 %v552, 0.0
  %v597 = vmax.f32 %v555, 0.0
  %v598 = vmax.f32 %v560, 0.0
  %v599 = vmax.f32 %v563, 0.0
  %v600 = vmax.f32 %v568, 0.0
  %v601 = vmax.f32 %v571, 0.0
  %v602 = vmax.f32 %v576, 0.0
  %v603 = vmax.f32 %v579, 0.0
  %v604 = vmax.f32 %v584, 0.0
  %v605 = vmax.f32 %v587, 0.0
  %v606 = vld [vmem:[%s5] sm:$0x1]
  %v607 = vpack.c.bf16 %v591, %v590
  %v608 = vpack.c.bf16 %v593, %v592
  %v609 = vpack.c.bf16 %v595, %v594
  %v610 = vpack.c.bf16 %v597, %v596
  %v611 = vpack.c.bf16 %v599, %v598
  %v612 = vpack.c.bf16 %v601, %v600
  %v613 = vpack.c.bf16 %v603, %v602
  %v614 = vpack.c.bf16 %v605, %v604
  %615 = vmatprep.subr.bf16.mxu0 0
  %616 = vmatpush1.bf16.msra.mxu0 %v607
  %617 = vmatprep.subr.bf16.mxu0 0
  %618 = vmatpush1.bf16.msra.mxu0 %v608
  %619 = vmatprep.subr.bf16.mxu0 0
  %620 = vmatpush1.bf16.msra.mxu0 %v609
  %621 = vmatprep.subr.bf16.mxu0 0
  %622 = vmatpush1.bf16.msra.mxu0 %v610
  %623 = vmatprep.subr.bf16.mxu0 0
  %624 = vmatpush1.bf16.msra.mxu0 %v611
  %625 = vmatprep.subr.bf16.mxu0 0
  %626 = vmatpush1.bf16.msra.mxu0 %v612
  %627 = vmatprep.subr.bf16.mxu0 0
  %628 = vmatpush1.bf16.msra.mxu0 %v613
  %629 = vmatprep.subr.bf16.mxu0 0
  %630 = vmatpush1.bf16.msra.mxu0 %v614
  %631 = vmatprep.subr.bf16.mxu0 0
  %632 = vmatpush1.bf16.msra.mxu0 0
  %633 = vmatprep.subr.bf16.mxu0 0
  %634 = vmatpush1.bf16.msra.mxu0 0
  %635 = vmatprep.subr.bf16.mxu0 0
  %636 = vmatpush1.bf16.msra.mxu0 0
  %637 = vmatprep.subr.bf16.mxu0 0
  %638 = vmatpush1.bf16.msra.mxu0 0
  %639 = vmatprep.subr.bf16.mxu0 0
  %640 = vmatpush1.bf16.msra.mxu0 0
  %641 = vmatprep.subr.bf16.mxu0 0
  %642 = vmatpush1.bf16.msra.mxu0 0
  %643 = vmatprep.subr.bf16.mxu0 0
  %644 = vmatpush1.bf16.msra.mxu0 0
  %645 = vmatprep.subr.bf16.mxu0 0
  %646 = vmatpush1.bf16.msra.mxu0 0
  %647 = vmatprep.mubr.bf16.mxu0 0
  %648 = vmatmul.mubr.bf16.gmra.mrb[0].mxu0 %v606
  %v649 = vpop.f32.mrb[0].mxu0
  %v650 = vadd.f32 0.0, %v649
  %v651 = vpop.f32.mrb[0].mxu0
  %v652 = vpop.f32.mrb[0].mxu0
  %v653 = vpop.f32.mrb[0].mxu0
  %654 = vdwg.mxu0
  %655 = vst [vmem:[%s6] sm:$0x1] %v650
  // Predicated region
  $region26: #{value_network_forward.1} parent=0 // pred_check
    _
  $region27: #{value_network_forward.1} parent=0 // pred_check_branch
    %657 = sbr.rel (0) target = $region29
  $region28: #{value_network_forward.1} parent=0 // pred_region
    _
  $region29: #{value_network_forward.1} parent=0 // pred_fallthru
    _
  // Predicated region
  $region30: #{value_network_forward.1} parent=0 // pred_check
    _
  $region31: #{value_network_forward.1} parent=0 // pred_check_branch
    %659 = sbr.rel (0) target = $region33
  $region32: #{value_network_forward.1} parent=0 // pred_region
    _
  $region33: #{value_network_forward.1} parent=0 // pred_fallthru
    _

</llo_original>
